<compile_context>
chip_gen: v5e
topology: v5e:2x2
jax: 0.10.0
libtpu: 0.0.40
codegen_flags: <defaults>
</compile_context>

<pallas_src>
import functools

import jax
import jax.numpy as jnp
from jax.experimental import pallas as pl
from jax.experimental.pallas import tpu as pltpu


_LANE = 128          # last block dim must be a multiple of the 128-lane width
_SUBLANE = 8         # sublane granule for f32
_FUSED_MAX_N = 256   # graphs up to this size use the single fused kernel


def _round_up(x, m):
    return ((x + m - 1) // m) * m


def _pad2d(a, rows, cols):
    pr, pc = rows - a.shape[0], cols - a.shape[1]
    if pr == 0 and pc == 0:
        return a
    return jnp.pad(a, ((0, pr), (0, pc)))


# ---------------------------------------------------------------------------
# Fused small-graph kernel: both GCN layers + ReLU in one pallas_call.
# ---------------------------------------------------------------------------
def _gcn_fused_kernel(adj_ref, x_ref, w1_ref, b1_ref, w2_ref, b2_ref, out_ref,
                      *, compute_dtype):
    adj = adj_ref[...].astype(compute_dtype)
    # Layer 1 linear: (N, Fin) @ (Fin, H) + (1, H), f32 accumulate + f32 bias.
    xw = jnp.dot(x_ref[...].astype(compute_dtype),
                 w1_ref[...].astype(compute_dtype),
                 preferred_element_type=jnp.float32) + b1_ref[...]
    # Graph propagation + fused ReLU: relu((N, N) @ (N, H)).
    h = jnp.maximum(
        jnp.dot(adj, xw.astype(compute_dtype),
                preferred_element_type=jnp.float32), 0.0)
    # TODO(synk): dropout is identity at inference (training=False).
    # Layer 2 linear + propagation: (N, N) @ ((N, H) @ (H, C) + (1, C)).
    hw = jnp.dot(h.astype(compute_dtype),
                 w2_ref[...].astype(compute_dtype),
                 preferred_element_type=jnp.float32) + b2_ref[...]
    out_ref[...] = jnp.dot(adj, hw.astype(compute_dtype),
                           preferred_element_type=jnp.float32)


def _gcn_fused(adj, x, params, *, compute_dtype):
    w1, b1, w2, b2 = params
    n = adj.shape[0]
    nfeat, nhid = w1.shape
    nclass = w2.shape[1]

    n_p = _round_up(n, _SUBLANE)
    f_p = _round_up(nfeat, _LANE)
    h_p = _round_up(nhid, _LANE)
    c_p = _round_up(nclass, _LANE)      # lane-dense output

    adj_p = _pad2d(adj, n_p, n_p)
    x_p = _pad2d(x, n_p, f_p)
    w1_p = _pad2d(w1, f_p, h_p)
    b1_p = _pad2d(b1, 1, h_p)
    w2_p = _pad2d(w2, h_p, c_p)
    b2_p = _pad2d(b2, 1, c_p)

    flops = 2 * n_p * (f_p * h_p + n_p * h_p + h_p * c_p + n_p * c_p)
    bytes_accessed = 4 * (n_p * n_p + n_p * f_p + f_p * h_p + h_p
                          + h_p * c_p + c_p + n_p * c_p)

    out = pl.pallas_call(
        functools.partial(_gcn_fused_kernel, compute_dtype=compute_dtype),
        out_shape=jax.ShapeDtypeStruct((n_p, c_p), jnp.float32),
        in_specs=[pl.BlockSpec(memory_space=pltpu.VMEM)] * 6,
        out_specs=pl.BlockSpec(memory_space=pltpu.VMEM),
        cost_estimate=pl.CostEstimate(flops=flops, transcendentals=0,
                                      bytes_accessed=bytes_accessed),
    )(adj_p, x_p, w1_p, b1_p, w2_p, b2_p)
    return out[:n, :nclass]


# ---------------------------------------------------------------------------
# Tiled large-graph path: per layer, a row-tiled linear prologue followed by a
# tiled (rows x K) adj @ h contraction with an f32 VMEM accumulator.
# ---------------------------------------------------------------------------
def _linear_kernel(x_ref, w_ref, b_ref, out_ref, *, compute_dtype):
    out_ref[...] = jnp.dot(x_ref[...].astype(compute_dtype),
                           w_ref[...].astype(compute_dtype),
                           preferred_element_type=jnp.float32) + b_ref[...]


def _linear_tiled(x, w, b, *, tm, compute_dtype):
    n, fin = x.shape
    fout = w.shape[1]
    return pl.pallas_call(
        functools.partial(_linear_kernel, compute_dtype=compute_dtype),
        out_shape=jax.ShapeDtypeStruct((n, fout), jnp.float32),
        grid_spec=pltpu.PrefetchScalarGridSpec(
            num_scalar_prefetch=0,
            grid=(n // tm,),
            in_specs=[pl.BlockSpec((tm, fin), lambda i: (i, 0)),
                      pl.BlockSpec((fin, fout), lambda i: (0, 0)),
                      pl.BlockSpec((1, fout), lambda i: (0, 0))],
            out_specs=pl.BlockSpec((tm, fout), lambda i: (i, 0))),
        compiler_params=pltpu.CompilerParams(
            dimension_semantics=("parallel",),
            vmem_limit_bytes=48 * 1024 * 1024),
    )(x, w, b)


def _spmm_kernel(adj_ref, h_ref, out_ref, acc_ref, *, apply_relu, compute_dtype):
    @pl.when(pl.program_id(1) == 0)
    def _():
        acc_ref[...] = jnp.zeros_like(acc_ref)

    acc_ref[...] += jnp.dot(adj_ref[...].astype(compute_dtype),
                            h_ref[...].astype(compute_dtype),
                            preferred_element_type=jnp.float32)

    @pl.when(pl.program_id(1) == pl.num_programs(1) - 1)
    def _():
        out = acc_ref[...]
        if apply_relu:
            out = jnp.maximum(out, 0.0)
        out_ref[...] = out


def _spmm_tiled(adj, h, *, tm, tk, apply_relu, compute_dtype):
    n = adj.shape[0]
    fout = h.shape[1]
    return pl.pallas_call(
        functools.partial(_spmm_kernel, apply_relu=apply_relu,
                          compute_dtype=compute_dtype),
        out_shape=jax.ShapeDtypeStruct((n, fout), jnp.float32),
        grid_spec=pltpu.PrefetchScalarGridSpec(
            num_scalar_prefetch=0,
            grid=(n // tm, n // tk),           # reduction (K) axis last
            in_specs=[pl.BlockSpec((tm, tk), lambda i, k: (i, k)),
                      pl.BlockSpec((tk, fout), lambda i, k: (k, 0))],
            out_specs=pl.BlockSpec((tm, fout), lambda i, k: (i, 0)),
            scratch_shapes=[pltpu.VMEM((tm, fout), jnp.float32)]),
        compiler_params=pltpu.CompilerParams(
            dimension_semantics=("parallel", "arbitrary"),
            vmem_limit_bytes=48 * 1024 * 1024),
    )(adj, h)


def _gcn_tiled(adj, x, params, *, compute_dtype):
    w1, b1, w2, b2 = params
    n = adj.shape[0]
    nclass = w2.shape[1]

    tile = 512 if n >= 1024 else 256     # >=512-wide tiles once graphs are big
    n_p = _round_up(n, tile)
    f_p = _round_up(x.shape[1], _LANE)
    h_p = _round_up(w1.shape[1], _LANE)
    c_p = _round_up(nclass, _LANE)       # lane-dense outputs

    adj_p = _pad2d(adj, n_p, n_p)
    x_p = _pad2d(x, n_p, f_p)
    w1_p = _pad2d(w1, f_p, h_p)
    b1_p = _pad2d(b1, 1, h_p)
    w2_p = _pad2d(w2, h_p, c_p)
    b2_p = _pad2d(b2, 1, c_p)

    # Layer 1: linear prologue (h computed once), then tiled adj @ h + fused ReLU.
    xw1 = _linear_tiled(x_p, w1_p, b1_p, tm=tile, compute_dtype=compute_dtype)
    h = _spmm_tiled(adj_p, xw1, tm=tile, tk=tile, apply_relu=True,
                    compute_dtype=compute_dtype)
    # TODO(synk): dropout is identity at inference (training=False).
    # Layer 2.
    hw2 = _linear_tiled(h, w2_p, b2_p, tm=tile, compute_dtype=compute_dtype)
    out = _spmm_tiled(adj_p, hw2, tm=tile, tk=tile, apply_relu=False,
                      compute_dtype=compute_dtype)
    return out[:n, :nclass]


# ---------------------------------------------------------------------------
# Public forward + init.
# ---------------------------------------------------------------------------
def gcn_forward(node_features, adj, params, *, compute_dtype=jnp.float32):
    """Full GCN forward. Returns (logits, logits) like the PyTorch module.

    compute_dtype=jnp.bfloat16 feeds the MXU in bf16 (f32 accumulation), the
    native fast path on v6e/v7x; the default f32 keeps reference-exact numerics.
    """
    n = adj.shape[0]
    if n <= _FUSED_MAX_N:
        out = _gcn_fused(adj, node_features, params, compute_dtype=compute_dtype)
    else:
        out = _gcn_tiled(adj, node_features, params, compute_dtype=compute_dtype)
    return out, out


def init_params(key, nfeat, nhid, nclass):
    """Deterministic init mimicking torch.nn.Linear defaults (uniform +-1/sqrt(fan_in))."""
    k1, k2, k3, k4 = jax.random.split(key, 4)
    s1 = 1.0 / jnp.sqrt(jnp.float32(nfeat))
    s2 = 1.0 / jnp.sqrt(jnp.float32(nhid))
    w1 = jax.random.uniform(k1, (nfeat, nhid), jnp.float32, -s1, s1)
    b1 = jax.random.uniform(k2, (1, nhid), jnp.float32, -s1, s1)
    w2 = jax.random.uniform(k3, (nhid, nclass), jnp.float32, -s2, s2)
    b2 = jax.random.uniform(k4, (1, nclass), jnp.float32, -s2, s2)
    return w1, b1, w2, b2


def _make_norm_adj(key, n):
    """Symmetric-normalized adjacency with self-loops (typical GCN preprocessing)."""
    a = (jax.random.uniform(key, (n, n)) < 0.3).astype(jnp.float32)
    a = jnp.maximum(a, a.T)
    a = a + jnp.eye(n, dtype=jnp.float32)
    d_inv_sqrt = 1.0 / jnp.sqrt(jnp.sum(a, axis=1))
    return a * d_inv_sqrt[:, None] * d_inv_sqrt[None, :]


def _reference(x, adj, params):
    w1, b1, w2, b2 = params
    h = jnp.maximum(adj @ (x @ w1 + b1), 0.0)
    return adj @ (h @ w2 + b2)


if __name__ == "__main__":
    key = jax.random.PRNGKey(0)
    k1, k2, k3, k4, k5, k6 = jax.random.split(key, 6)

    # --- Small graph: exercises the fused single-kernel path ---
    N, NFEAT, NHID, NCLASS = 16, 32, 64, 8
    x = jax.random.normal(k1, (N, NFEAT), jnp.float32)
    adj = _make_norm_adj(k2, N)
    params = init_params(k3, NFEAT, NHID, NCLASS)

    out1, out2 = gcn_forward(x, adj, params)
    jax.block_until_ready(out1)
    ref = _reference(x, adj, params)
    assert out1.shape == (N, NCLASS)
    assert jnp.allclose(out1, ref, atol=1e-4, rtol=1e-4)

    # --- Larger graph: exercises the tiled/pipelined path (grid over rows + K) ---
    N2, NFEAT2, NHID2, NCLASS2 = 512, 48, 96, 10
    x2 = jax.random.normal(k4, (N2, NFEAT2), jnp.float32)
    adj2 = _make_norm_adj(k5, N2)
    params2 = init_params(k6, NFEAT2, NHID2, NCLASS2)

    out_t, _ = gcn_forward(x2, adj2, params2)
    jax.block_until_ready(out_t)
    ref2 = _reference(x2, adj2, params2)
    assert out_t.shape == (N2, NCLASS2)
    assert jnp.allclose(out_t, ref2, atol=5e-3, rtol=5e-3)

    print("KERNEL_OK")
</pallas_src>

<mosaic_0001>
module attributes {stable_mosaic.version = 11 : i64} {
  func.func @_gcn_fused_kernel(%arg0: memref<16x16xf32, #tpu.memory_space<vmem>>, %arg1: memref<16x128xf32, #tpu.memory_space<vmem>>, %arg2: memref<128x128xf32, #tpu.memory_space<vmem>>, %arg3: memref<1x128xf32, #tpu.memory_space<vmem>>, %arg4: memref<128x128xf32, #tpu.memory_space<vmem>>, %arg5: memref<1x128xf32, #tpu.memory_space<vmem>>, %arg6: memref<16x128xf32, #tpu.memory_space<vmem>>) attributes {dimension_semantics = [], scalar_prefetch = 0 : i64, scratch_operands = 0 : i64, tpu.core_type = #tpu.core_type<tc>} {
    %c0 = arith.constant 0 : index
    %c0_0 = arith.constant 0 : index
    %0 = vector.load %arg0[%c0, %c0_0] : memref<16x16xf32, #tpu.memory_space<vmem>>, vector<16x16xf32>
    %c0_1 = arith.constant 0 : index
    %c0_2 = arith.constant 0 : index
    %1 = vector.load %arg1[%c0_1, %c0_2] : memref<16x128xf32, #tpu.memory_space<vmem>>, vector<16x128xf32>
    %c0_3 = arith.constant 0 : index
    %c0_4 = arith.constant 0 : index
    %2 = vector.load %arg2[%c0_3, %c0_4] : memref<128x128xf32, #tpu.memory_space<vmem>>, vector<128x128xf32>
    %cst = arith.constant dense<0.000000e+00> : vector<16x128xf32>
    %3 = tpu.matmul %1, %2, %cst {dimension_numbers = #tpu.dot_dimension_numbers<[1], [0], [0], [1], [0, 0, 1, 1], [], []>} : vector<16x128xf32>, vector<128x128xf32>, vector<16x128xf32> -> vector<16x128xf32>
    %c0_5 = arith.constant 0 : index
    %c0_6 = arith.constant 0 : index
    %4 = vector.load %arg3[%c0_5, %c0_6] : memref<1x128xf32, #tpu.memory_space<vmem>>, vector<1x128xf32>
    %5 = vector.broadcast %4 : vector<1x128xf32> to vector<16x128xf32>
    %6 = arith.addf %3, %5 : vector<16x128xf32>
    %cst_7 = arith.constant dense<0.000000e+00> : vector<16x128xf32>
    %7 = tpu.matmul %0, %6, %cst_7 {dimension_numbers = #tpu.dot_dimension_numbers<[1], [0], [0], [1], [0, 0, 1, 1], [], []>} : vector<16x16xf32>, vector<16x128xf32>, vector<16x128xf32> -> vector<16x128xf32>
    %cst_8 = arith.constant 0.000000e+00 : f32
    %8 = vector.broadcast %cst_8 : f32 to vector<16x128xf32>
    %9 = arith.maximumf %7, %8 : vector<16x128xf32>
    %c0_9 = arith.constant 0 : index
    %c0_10 = arith.constant 0 : index
    %10 = vector.load %arg4[%c0_9, %c0_10] : memref<128x128xf32, #tpu.memory_space<vmem>>, vector<128x128xf32>
    %cst_11 = arith.constant dense<0.000000e+00> : vector<16x128xf32>
    %11 = tpu.matmul %9, %10, %cst_11 {dimension_numbers = #tpu.dot_dimension_numbers<[1], [0], [0], [1], [0, 0, 1, 1], [], []>} : vector<16x128xf32>, vector<128x128xf32>, vector<16x128xf32> -> vector<16x128xf32>
    %c0_12 = arith.constant 0 : index
    %c0_13 = arith.constant 0 : index
    %12 = vector.load %arg5[%c0_12, %c0_13] : memref<1x128xf32, #tpu.memory_space<vmem>>, vector<1x128xf32>
    %13 = vector.broadcast %12 : vector<1x128xf32> to vector<16x128xf32>
    %14 = arith.addf %11, %13 : vector<16x128xf32>
    %cst_14 = arith.constant dense<0.000000e+00> : vector<16x128xf32>
    %15 = tpu.matmul %0, %14, %cst_14 {dimension_numbers = #tpu.dot_dimension_numbers<[1], [0], [0], [1], [0, 0, 1, 1], [], []>} : vector<16x16xf32>, vector<16x128xf32>, vector<16x128xf32> -> vector<16x128xf32>
    %c0_15 = arith.constant 0 : index
    %c0_16 = arith.constant 0 : index
    %16 = vector.load %arg6[%c0_15, %c0_16] : memref<16x128xf32, #tpu.memory_space<vmem>>, vector<16x128xf32>
    tpu.vector_store %arg6[%c0_15, %c0_16], %15 {strides = array<i32>} : memref<16x128xf32, #tpu.memory_space<vmem>>, vector<16x128xf32>,
    return
  }
}

</mosaic_0001>

<llo_original>
// kernel: tpu_custom_call.1
$region0: #{tpu_custom_call.1}
  #allocation0 [shape = 'u32[]', space=smem, size = 0x4, offset = 0x4, fixed_abs, tag = 'smem constant byte address 0x4 - core index']
  #allocation1 [shape = 'u32[72,128]{1,0:T(1,128)}', space=vmem, size = 0x9000, scoped, tag = 'internal scratch']
  %s0 = inlined_call_operand.hbm [shape: f32[16,16], index: 0, kind: input, shape index: {}]
  %s1 = inlined_call_operand.hbm [shape: f32[16,128], index: 1, kind: input, shape index: {}]
  %s2 = inlined_call_operand.hbm [shape: f32[128,128], index: 2, kind: input, shape index: {}]
  %s3 = inlined_call_operand.vmem [shape: f32[1,128], index: 3, kind: input, shape index: {}]
  %s4 = inlined_call_operand.hbm [shape: f32[128,128], index: 4, kind: input, shape index: {}]
  %s5 = inlined_call_operand.vmem [shape: f32[1,128], index: 5, kind: input, shape index: {}]
  %s6 = inlined_call_operand.hbm [shape: f32[16,128], index: 6, kind: output, shape index: {}]
  %s7 = sld [smem:[#allocation0]]
  $region50: #{tpu_custom_call.1} parent=0
    _
  %s9 = ssub.s32 1, %s7
  %s10 = scalar_select 0, %s9, %s7
  $region1: #{tpu_custom_call.1} parent=0
    #allocation2 [shape = 'u8[8192]{0}', space=vmem, size = 0x2000, scoped, tag = 'input window, operand 0, single buffered']
    #allocation3 [shape = 's32[1]{0}', space=sflag, size = 0x4, scoped, tag = 'scoped memory for tpu_custom_call.1']
    #allocation4 [shape = 's32[1]{0}', space=sflag, size = 0x4, scoped, tag = 'scoped memory for tpu_custom_call.1']
    #allocation5 [shape = 'u8[8192]{0}', space=vmem, size = 0x2000, scoped, tag = 'input window, operand 1, single buffered']
    #allocation6 [shape = 's32[1]{0}', space=sflag, size = 0x4, scoped, tag = 'scoped memory for tpu_custom_call.1']
    #allocation7 [shape = 'u8[65536]{0}', space=vmem, size = 0x10000, scoped, tag = 'input window, operand 2, single buffered']
    #allocation8 [shape = 'u8[65536]{0}', space=vmem, size = 0x10000, scoped, tag = 'input window, operand 4, single buffered']
    #allocation9 [shape = 's32[1]{0}', space=sflag, size = 0x4, scoped, tag = 'scoped memory for tpu_custom_call.1']
    #allocation10 [shape = 'u8[8192]{0}', space=vmem, size = 0x2000, scoped, tag = 'output window, operand 0, single buffered']
    %11 = vsyncpa [#allocation3], 0
    %12 = vsyncpa [#allocation6], 0
    %13 = vsyncpa [#allocation9], 0
    %14 = vsyncpa [#allocation4], 0
    // Predicated region
    $region2: #{tpu_custom_call.1} parent=1 // pred_check
      _
    $region3: #{tpu_custom_call.1} parent=1 // pred_check_branch
      %16 = sbr.rel (0) target = $region5
    $region4: #{tpu_custom_call.1} parent=1 // pred_region
      %18 = vsyncadd [#allocation3], 0
      %s19 = sshll.u32 %s0, 4
      %s20 = int_to_ptr.hbm [resolvable:$true] %s19
      %s21 = sshll.u32 [#allocation2], 4
      %s22 = int_to_ptr.vmem [resolvable:$true] %s21
      %27 = dma.hbm_to_vmem [thread:$0]  %s20, 256, %s22, [#allocation3], 128, 128, 8
    $region5: #{tpu_custom_call.1} parent=1 // pred_fallthru
      _
    // Predicated region
    $region6: #{tpu_custom_call.1} parent=1 // pred_check
      _
    $region7: #{tpu_custom_call.1} parent=1 // pred_check_branch
      %29 = sbr.rel (0) target = $region9
    $region8: #{tpu_custom_call.1} parent=1 // pred_region
      %31 = vsyncadd [#allocation6], 0
      %s32 = sshll.u32 %s1, 4
      %s33 = int_to_ptr.hbm [resolvable:$true] %s32
      %s34 = sshll.u32 [#allocation5], 4
      %s35 = int_to_ptr.vmem [resolvable:$true] %s34
      %40 = dma.hbm_to_vmem [thread:$0]  %s33, 256, %s35, [#allocation6], 128, 128, 8
    $region9: #{tpu_custom_call.1} parent=1 // pred_fallthru
      _
    // Predicated region
    $region10: #{tpu_custom_call.1} parent=1 // pred_check
      _
    $region11: #{tpu_custom_call.1} parent=1 // pred_check_branch
      %42 = sbr.rel (0) target = $region13
    $region12: #{tpu_custom_call.1} parent=1 // pred_region
      %44 = vsyncadd [#allocation6], 0
      %s45 = sshll.u32 %s2, 4
      %s46 = int_to_ptr.hbm [resolvable:$true] %s45
      %s47 = sshll.u32 [#allocation7], 4
      %s48 = int_to_ptr.vmem [resolvable:$true] %s47
      %53 = dma.hbm_to_vmem [thread:$0]  %s46, 2048, %s48, [#allocation6], 128, 128, 8
    $region13: #{tpu_custom_call.1} parent=1 // pred_fallthru
      _
    // Predicated region
    $region14: #{tpu_custom_call.1} parent=1 // pred_check
      _
    $region15: #{tpu_custom_call.1} parent=1 // pred_check_branch
      %55 = sbr.rel (0) target = $region17
    $region16: #{tpu_custom_call.1} parent=1 // pred_region
      _
    $region17: #{tpu_custom_call.1} parent=1 // pred_fallthru
      _
    // Predicated region
    $region18: #{tpu_custom_call.1} parent=1 // pred_check
      _
    $region19: #{tpu_custom_call.1} parent=1 // pred_check_branch
      %57 = sbr.rel (0) target = $region21
    $region20: #{tpu_custom_call.1} parent=1 // pred_region
      %59 = vsyncadd [#allocation9], 0
      %s60 = sshll.u32 %s4, 4
      %s61 = int_to_ptr.hbm [resolvable:$true] %s60
      %s62 = sshll.u32 [#allocation8], 4
      %s63 = int_to_ptr.vmem [resolvable:$true] %s62
      %68 = dma.hbm_to_vmem [thread:$0]  %s61, 2048, %s63, [#allocation9], 128, 128, 8
    $region21: #{tpu_custom_call.1} parent=1 // pred_fallthru
      _
    // Predicated region
    $region22: #{tpu_custom_call.1} parent=1 // pred_check
      _
    $region23: #{tpu_custom_call.1} parent=1 // pred_check_branch
      %70 = sbr.rel (0) target = $region25
    $region24: #{tpu_custom_call.1} parent=1 // pred_region
      _
    $region25: #{tpu_custom_call.1} parent=1 // pred_fallthru
      _
    // Predicated region
    $region26: #{tpu_custom_call.1} parent=1 // pred_check
      _
    $region27: #{tpu_custom_call.1} parent=1 // pred_check_branch
      %72 = sbr.rel (0) target = $region29
    $region28: #{tpu_custom_call.1} parent=1 // pred_region
      %74 = dma.done [#allocation3], 256
    $region29: #{tpu_custom_call.1} parent=1 // pred_fallthru
      _
    // Predicated region
    $region30: #{tpu_custom_call.1} parent=1 // pred_check
      _
    $region31: #{tpu_custom_call.1} parent=1 // pred_check_branch
      %76 = sbr.rel (0) target = $region33
    $region32: #{tpu_custom_call.1} parent=1 // pred_region
      %78 = dma.done [#allocation6], 256
    $region33: #{tpu_custom_call.1} parent=1 // pred_fallthru
      _
    // Predicated region
    $region34: #{tpu_custom_call.1} parent=1 // pred_check
      _
    $region35: #{tpu_custom_call.1} parent=1 // pred_check_branch
      %80 = sbr.rel (0) target = $region37
    $region36: #{tpu_custom_call.1} parent=1 // pred_region
      %82 = dma.done [#allocation6], 2048
    $region37: #{tpu_custom_call.1} parent=1 // pred_fallthru
      _
    // Predicated region
    $region38: #{tpu_custom_call.1} parent=1 // pred_check
      _
    $region39: #{tpu_custom_call.1} parent=1 // pred_check_branch
      %84 = sbr.rel (0) target = $region41
    $region40: #{tpu_custom_call.1} parent=1 // pred_region
      %86 = dma.done [#allocation9], 2048
    $region41: #{tpu_custom_call.1} parent=1 // pred_fallthru
      _
    %v87 = vld [vmem:[#allocation2] sm:$0xff]
    %v88 = vld [vmem:[#allocation2 + $0x8] sm:$0xff]
    %v89 = vld [vmem:[#allocation5] sm:$0xff]
    %v90 = vld [vmem:[#allocation5 + $0x8] sm:$0xff]
    %v91 = vld [vmem:[#allocation7] sm:$0xff]
    %v92 = vld [vmem:[#allocation7 + $0x8] sm:$0xff]
    %v93 = vld [vmem:[#allocation7 + $0x10] sm:$0xff]
    %v94 = vld [vmem:[#allocation7 + $0x18] sm:$0xff]
    %v95 = vld [vmem:[#allocation7 + $0x20] sm:$0xff]
    %v96 = vld [vmem:[#allocation7 + $0x28] sm:$0xff]
    %v97 = vld [vmem:[#allocation7 + $0x30] sm:$0xff]
    %v98 = vld [vmem:[#allocation7 + $0x38] sm:$0xff]
    %v99 = vld [vmem:[#allocation7 + $0x40] sm:$0xff]
    %v100 = vld [vmem:[#allocation7 + $0x48] sm:$0xff]
    %v101 = vld [vmem:[#allocation7 + $0x50] sm:$0xff]
    %v102 = vld [vmem:[#allocation7 + $0x58] sm:$0xff]
    %v103 = vld [vmem:[#allocation7 + $0x60] sm:$0xff]
    %v104 = vld [vmem:[#allocation7 + $0x68] sm:$0xff]
    %v105 = vld [vmem:[#allocation7 + $0x70] sm:$0xff]
    %v106 = vld [vmem:[#allocation7 + $0x78] sm:$0xff]
    %v107 = vld [vmem:[%s3] sm:$0x1]
    %v109 = vperm.slane %v107, 0
    %111 = vmatpush.msra.mxu0 %v106
    %112 = vmatpush.msra.mxu0 %v105
    %113 = vmatpush.msra.mxu0 %v104
    %114 = vmatpush.msra.mxu0 %v103
    %115 = vmatpush.msra.mxu0 %v102
    %116 = vmatpush.msra.mxu0 %v101
    %117 = vmatpush.msra.mxu0 %v100
    %118 = vmatpush.msra.mxu0 %v99
    %119 = vmatpush.msra.mxu0 %v98
    %120 = vmatpush.msra.mxu0 %v97
    %121 = vmatpush.msra.mxu0 %v96
    %122 = vmatpush.msra.mxu0 %v95
    %123 = vmatpush.msra.mxu0 %v94
    %124 = vmatpush.msra.mxu0 %v93
    %125 = vmatpush.msra.mxu0 %v92
    %126 = vmatpush.msra.mxu0 %v91
    %127 = vmatmul.f32.gmra.mxu0 %v89
    %v128 = vpop.f32.mrf.mxu0
    %v129 = vadd.f32 %v109, %v128
    %130 = vmatmul.f32.gmra.mxu0 %v90
    %v131 = vpop.f32.mrf.mxu0
    %v132 = vadd.f32 %v109, %v131
    %133 = vdwg.mxu0
    %vm134 = vcmask 130048
    %v136 = vsel %vm134, %v87, 0
    %v139 = vsel %vm134, %v88, 0
    %141 = vmatpush.msra.mxu0 0.0
    %142 = vmatpush.msra.mxu0 0.0
    %143 = vmatpush.msra.mxu0 0.0
    %144 = vmatpush.msra.mxu0 0.0
    %145 = vmatpush.msra.mxu0 0.0
    %146 = vmatpush.msra.mxu0 0.0
    %147 = vmatpush.msra.mxu0 0.0
    %148 = vmatpush.msra.mxu0 0.0
    %149 = vmatpush.msra.mxu0 0.0
    %150 = vmatpush.msra.mxu0 0.0
    %151 = vmatpush.msra.mxu0 0.0
    %152 = vmatpush.msra.mxu0 0.0
    %153 = vmatpush.msra.mxu0 0.0
    %154 = vmatpush.msra.mxu0 0.0
    %155 = vmatpush.msra.mxu0 %v132
    %156 = vmatpush.msra.mxu0 %v129
    %157 = vmatmul.f32.gmra.mxu0 %v136
    %v158 = vpop.f32.mrf.mxu0
    %v159 = vadd.f32 0.0, %v158
    %160 = vmatmul.f32.gmra.mxu0 %v139
    %v161 = vpop.f32.mrf.mxu0
    %v162 = vadd.f32 0.0, %v161
    %163 = vdwg.mxu0
    %v164 = vmax.f32 %v159, 0.0
    %v165 = vmax.f32 %v162, 0.0
    %v166 = vld [vmem:[#allocation8] sm:$0xff]
    %v167 = vld [vmem:[#allocation8 + $0x8] sm:$0xff]
    %v168 = vld [vmem:[#allocation8 + $0x10] sm:$0xff]
    %v169 = vld [vmem:[#allocation8 + $0x18] sm:$0xff]
    %v170 = vld [vmem:[#allocation8 + $0x20] sm:$0xff]
    %v171 = vld [vmem:[#allocation8 + $0x28] sm:$0xff]
    %v172 = vld [vmem:[#allocation8 + $0x30] sm:$0xff]
    %v173 = vld [vmem:[#allocation8 + $0x38] sm:$0xff]
    %v174 = vld [vmem:[#allocation8 + $0x40] sm:$0xff]
    %v175 = vld [vmem:[#allocation8 + $0x48] sm:$0xff]
    %v176 = vld [vmem:[#allocation8 + $0x50] sm:$0xff]
    %v177 = vld [vmem:[#allocation8 + $0x58] sm:$0xff]
    %v178 = vld [vmem:[#allocation8 + $0x60] sm:$0xff]
    %v179 = vld [vmem:[#allocation8 + $0x68] sm:$0xff]
    %v180 = vld [vmem:[#allocation8 + $0x70] sm:$0xff]
    %v181 = vld [vmem:[#allocation8 + $0x78] sm:$0xff]
    %v182 = vld [vmem:[%s5] sm:$0x1]
    %v184 = vperm.slane %v182, 0
    %186 = vmatpush.msra.mxu0 %v181
    %187 = vmatpush.msra.mxu0 %v180
    %188 = vmatpush.msra.mxu0 %v179
    %189 = vmatpush.msra.mxu0 %v178
    %190 = vmatpush.msra.mxu0 %v177
    %191 = vmatpush.msra.mxu0 %v176
    %192 = vmatpush.msra.mxu0 %v175
    %193 = vmatpush.msra.mxu0 %v174
    %194 = vmatpush.msra.mxu0 %v173
    %195 = vmatpush.msra.mxu0 %v172
    %196 = vmatpush.msra.mxu0 %v171
    %197 = vmatpush.msra.mxu0 %v170
    %198 = vmatpush.msra.mxu0 %v169
    %199 = vmatpush.msra.mxu0 %v168
    %200 = vmatpush.msra.mxu0 %v167
    %201 = vmatpush.msra.mxu0 %v166
    %202 = vmatmul.f32.gmra.mxu0 %v164
    %v203 = vpop.f32.mrf.mxu0
    %v204 = vadd.f32 %v184, %v203
    %205 = vmatmul.f32.gmra.mxu0 %v165
    %v206 = vpop.f32.mrf.mxu0
    %v207 = vadd.f32 %v184, %v206
    %208 = vdwg.mxu0
    %209 = vmatpush.msra.mxu0 0.0
    %210 = vmatpush.msra.mxu0 0.0
    %211 = vmatpush.msra.mxu0 0.0
    %212 = vmatpush.msra.mxu0 0.0
    %213 = vmatpush.msra.mxu0 0.0
    %214 = vmatpush.msra.mxu0 0.0
    %215 = vmatpush.msra.mxu0 0.0
    %216 = vmatpush.msra.mxu0 0.0
    %217 = vmatpush.msra.mxu0 0.0
    %218 = vmatpush.msra.mxu0 0.0
    %219 = vmatpush.msra.mxu0 0.0
    %220 = vmatpush.msra.mxu0 0.0
    %221 = vmatpush.msra.mxu0 0.0
    %222 = vmatpush.msra.mxu0 0.0
    %223 = vmatpush.msra.mxu0 %v207
    %224 = vmatpush.msra.mxu0 %v204
    %225 = vmatmul.f32.gmra.mxu0 %v136
    %v226 = vpop.f32.mrf.mxu0
    %v227 = vadd.f32 0.0, %v226
    %228 = vmatmul.f32.gmra.mxu0 %v139
    %v229 = vpop.f32.mrf.mxu0
    %v230 = vadd.f32 0.0, %v229
    %231 = vdwg.mxu0
    %232 = vst [vmem:[#allocation10] sm:$0xff] %v227
    %233 = vst [vmem:[#allocation10 + $0x8] sm:$0xff] %v230
    // Predicated region
    $region42: #{tpu_custom_call.1} parent=1 // pred_check
      _
    $region43: #{tpu_custom_call.1} parent=1 // pred_check_branch
      %235 = sbr.rel (0) target = $region45
    $region44: #{tpu_custom_call.1} parent=1 // pred_region
      %237 = vsyncadd [#allocation4], 0
      %s238 = sshll.u32 [#allocation10], 4
      %s239 = int_to_ptr.vmem [resolvable:$true] %s238
      %s240 = sshll.u32 %s6, 4
      %s241 = int_to_ptr.hbm [resolvable:$true] %s240
      %246 = dma.vmem_to_hbm [thread:$0]  %s239, 256, %s241, [#allocation4], 128, 128, 8
    $region45: #{tpu_custom_call.1} parent=1 // pred_fallthru
      _
    // Predicated region
    $region46: #{tpu_custom_call.1} parent=1 // pred_check
      _
    $region47: #{tpu_custom_call.1} parent=1 // pred_check_branch
      %248 = sbr.rel (0) target = $region49
    $region48: #{tpu_custom_call.1} parent=1 // pred_region
      %250 = dma.done [#allocation4], 256
    $region49: #{tpu_custom_call.1} parent=1 // pred_fallthru
      _
    %251 = vsyncpa [#allocation3], 1
    %252 = vsyncpa [#allocation6], 1
    %253 = vsyncpa [#allocation9], 1
    %254 = vsyncpa [#allocation4], 1

</llo_original>
